<compile_context>
chip_gen: v7x
topology: tpu7x:2x2x1
jax: 0.10.0
libtpu: 0.0.40
codegen_flags: <defaults>
</compile_context>

<pallas_src>
import functools
import math

import jax
import jax.numpy as jnp
from jax.experimental import pallas as pl
from jax.experimental.pallas import tpu as pltpu


def _add_pe_kernel(x_ref, pe_ref, o_ref):
    # x_ref/o_ref: (b_blk, tile, d_model); pe_ref: (tile_pe, d_model) with
    # tile_pe >= tile (tile_pe > tile only when seq < one sublane group).
    tile = x_ref.shape[1]
    o_ref[...] = x_ref[...] + pe_ref[:tile, :].astype(x_ref.dtype)


def make_positional_encoding_table(max_len, d_model, dtype=jnp.float32):
    """PyTorch register_buffer replica: interleaved sin/cos, [max_len, d_model].

    Built once at init, already in the activation dtype, so no per-call
    slice/astype copies are needed.
    """
    position = jnp.arange(max_len, dtype=jnp.float32)[:, None]            # [L,1]
    div_term = jnp.exp(jnp.arange(0, d_model, 2, dtype=jnp.float32)
                       * (-(math.log(10000.0) / d_model)))                # [D/2]
    angles = position * div_term                                          # [L,D/2]
    pe = jnp.stack([jnp.sin(angles), jnp.cos(angles)], axis=-1)           # [L,D/2,2]
    pe = pe.reshape(max_len, d_model)            # pe[:,0::2]=sin, pe[:,1::2]=cos
    return pe.astype(dtype)


def _sublane_rows(dtype):
    # Packed-sublane row multiple per dtype width.
    return {4: 8, 2: 16, 1: 32}.get(jnp.dtype(dtype).itemsize, 8)


def _choose_blocks(batch, seq, d_model, dtype, target_block_bytes):
    sub = _sublane_rows(dtype)
    itemsize = jnp.dtype(dtype).itemsize
    row_budget = max(sub, target_block_bytes // max(1, d_model * itemsize))
    row_budget -= row_budget % sub
    if seq >= sub:
        # tile: multiple of the sublane group, <= seq, <= row budget.
        tile = max(sub, min(seq - seq % sub, row_budget))
        tile_pe = tile
    else:
        # seq smaller than one sublane group: x tile = full dim (allowed);
        # pe tile rounded up to a sublane multiple and sliced in-kernel.
        tile, tile_pe = seq, sub
    n_tiles = pl.cdiv(seq, tile)
    b_blk = max(1, min(batch, row_budget // max(tile, 1)))
    if n_tiles == 1 and batch >= 2:
        # Keep at least 2 grid steps so v7x can split across its two TCs.
        b_blk = min(b_blk, -(-batch // 2))
    n_bblk = pl.cdiv(batch, b_blk)
    return tile, tile_pe, b_blk, n_tiles, n_bblk


def _positional_encoding_impl(x, pe, *, in_place=False,
                              target_block_bytes=2 * 1024 * 1024):
    """x: [batch, seq, d_model]; pe: [max_len, d_model] with max_len >= seq."""
    batch, seq, d_model = x.shape
    if pe.shape[0] < seq:
        raise ValueError(f"seq {seq} exceeds pe max_len {pe.shape[0]}")

    tile, tile_pe, b_blk, n_tiles, n_bblk = _choose_blocks(
        batch, seq, d_model, x.dtype, target_block_bytes)

    elem = jnp.dtype(x.dtype).itemsize
    cost = pl.CostEstimate(
        flops=batch * seq * d_model,
        transcendentals=0,
        bytes_accessed=(2 * batch * seq + seq) * d_model * elem,
    )

    out = pl.pallas_call(
        _add_pe_kernel,
        out_shape=jax.ShapeDtypeStruct((batch, seq, d_model), x.dtype),
        grid_spec=pltpu.PrefetchScalarGridSpec(
            num_scalar_prefetch=0,
            grid=(n_tiles, n_bblk),                  # batch-block axis innermost
            in_specs=[
                pl.BlockSpec((b_blk, tile, d_model), lambda j, b: (b, j, 0)),  # x
                pl.BlockSpec((tile_pe, d_model), lambda j, b: (j, 0)),         # pe
            ],
            out_specs=pl.BlockSpec((b_blk, tile, d_model), lambda j, b: (b, j, 0)),
        ),
        compiler_params=pltpu.CompilerParams(
            dimension_semantics=("parallel", "parallel")),
        cost_estimate=cost,
        input_output_aliases={0: 0} if in_place else {},
    )(x, pe)
    # Dropout: identity (eval mode).
    return out


# Standard entry point (output is a fresh buffer).
positional_encoding = jax.jit(
    _positional_encoding_impl,
    static_argnames=("in_place", "target_block_bytes"))

# In-place variant: output aliases x's HBM buffer; x is donated at the jit
# boundary so XLA does not insert a defensive copy.
positional_encoding_inplace = jax.jit(
    functools.partial(_positional_encoding_impl, in_place=True),
    donate_argnums=(0,))


if __name__ == "__main__":
    d_model, max_len = 512, 5000          # R2Gen uses d_model=512
    pe = make_positional_encoding_table(max_len, d_model, dtype=jnp.float32)

    # Case 1: small demo shapes (batch=2, seq=8).
    x = jax.random.normal(jax.random.PRNGKey(0), (2, 8, d_model), jnp.float32)
    y = jax.block_until_ready(positional_encoding(x, pe))
    assert y.shape == x.shape
    assert jnp.allclose(y, x + pe[None, :8, :], atol=1e-6, rtol=1e-6)

    # Case 2: seq not a tile multiple -> partial boundary block masked by
    # Pallas (no wrapper pad/slice copies); small block budget forces >1 tile.
    x2 = jax.random.normal(jax.random.PRNGKey(1), (2, 100, d_model), jnp.float32)
    y2 = jax.block_until_ready(
        positional_encoding(x2, pe, target_block_bytes=64 * 1024))
    assert jnp.allclose(y2, x2 + pe[None, :100, :], atol=1e-6, rtol=1e-6)

    # Case 3: seq smaller than one sublane group (pe tile sliced in-kernel).
    x3 = jax.random.normal(jax.random.PRNGKey(2), (2, 5, d_model), jnp.float32)
    y3 = jax.block_until_ready(positional_encoding(x3, pe))
    assert jnp.allclose(y3, x3 + pe[None, :5, :], atol=1e-6, rtol=1e-6)

    # Case 4: in-place path (x donated; output aliases x's buffer).
    x4 = jax.random.normal(jax.random.PRNGKey(3), (2, 40, d_model), jnp.float32)
    ref4 = x4 + pe[None, :40, :]
    y4 = jax.block_until_ready(positional_encoding_inplace(x4, pe))
    assert jnp.allclose(y4, ref4, atol=1e-6, rtol=1e-6)

    print("KERNEL_OK")
</pallas_src>

<mosaic_0001>
module attributes {stable_mosaic.version = 11 : i64} {
  func.func @_add_pe_kernel(%arg0: i32, %arg1: i32, %arg2: memref<1x8x512xf32, #tpu.memory_space<vmem>>, %arg3: memref<8x512xf32, #tpu.memory_space<vmem>>, %arg4: memref<1x8x512xf32, #tpu.memory_space<vmem>>) attributes {dimension_semantics = [#tpu.dimension_semantics<parallel>, #tpu.dimension_semantics<parallel>], iteration_bounds = array<i64: 1, 2>, scalar_prefetch = 0 : i64, scratch_operands = 0 : i64, tpu.core_type = #tpu.core_type<tc>, window_params = [{transform_indices = @transform_0, window_bounds = array<i64: 1, 8, 512>}, {transform_indices = @transform_1, window_bounds = array<i64: 8, 512>}, {transform_indices = @transform_2, window_bounds = array<i64: 1, 8, 512>}]} {
    %c0 = arith.constant 0 : index
    %c0_0 = arith.constant 0 : index
    %c0_1 = arith.constant 0 : index
    %0 = vector.load %arg2[%c0, %c0_0, %c0_1] : memref<1x8x512xf32, #tpu.memory_space<vmem>>, vector<1x8x512xf32>
    %c0_2 = arith.constant 0 : index
    %c0_3 = arith.constant 0 : index
    %1 = vector.load %arg3[%c0_2, %c0_3] : memref<8x512xf32, #tpu.memory_space<vmem>>, vector<8x512xf32>
    %2 = vector.shape_cast %1 : vector<8x512xf32> to vector<1x8x512xf32>
    %3 = arith.addf %0, %2 : vector<1x8x512xf32>
    %c0_4 = arith.constant 0 : index
    %c0_5 = arith.constant 0 : index
    %c0_6 = arith.constant 0 : index
    %4 = vector.load %arg4[%c0_4, %c0_5, %c0_6] : memref<1x8x512xf32, #tpu.memory_space<vmem>>, vector<1x8x512xf32>
    tpu.vector_store %arg4[%c0_4, %c0_5, %c0_6], %3 {strides = array<i32>} : memref<1x8x512xf32, #tpu.memory_space<vmem>>, vector<1x8x512xf32>,
    return
  }
  func.func @transform_0(%arg0: i32, %arg1: i32) -> (i32, i32, i32) {
    %c0_i32 = arith.constant 0 : i32
    %c0_i32_0 = arith.constant 0 : i32
    return %arg1, %arg0, %c0_i32 : i32, i32, i32
  }
  func.func @transform_1(%arg0: i32, %arg1: i32) -> (i32, i32) {
    %c0_i32 = arith.constant 0 : i32
    %c0_i32_0 = arith.constant 0 : i32
    return %arg0, %c0_i32 : i32, i32
  }
  func.func @transform_2(%arg0: i32, %arg1: i32) -> (i32, i32, i32) {
    %c0_i32 = arith.constant 0 : i32
    %c0_i32_0 = arith.constant 0 : i32
    return %arg1, %arg0, %c0_i32 : i32, i32, i32
  }
}

</mosaic_0001>

<llo_original>
// kernel: _positional_encoding_impl.1
$region0: #{_positional_encoding_impl.1}
  #allocation0 [shape = 'u32[]', space=smem, size = 0x4, offset = 0x4, fixed_abs, tag = 'smem constant byte address 0x4 - core index']
  #allocation1 [shape = 'u32[144,128]{1,0:T(1,128)}', space=vmem, size = 0x12000, scoped, tag = 'internal scratch']
  %s0 = inlined_call_operand.hbm [shape: f32[2,8,512], index: 0, kind: input, shape index: {}]
  %s1 = inlined_call_operand.hbm [shape: f32[5000,512], index: 1, kind: input, shape index: {}]
  %s2 = inlined_call_operand.hbm [shape: f32[2,8,512], index: 2, kind: output, shape index: {}]
  %s3 = sld [smem:[#allocation0]]
  $region49: #{_positional_encoding_impl.1} parent=0
    _
  %s5 = ssub.s32 1, %s3
  %s6 = scalar_select 0, %s5, %s3
  $region1: #{_positional_encoding_impl.1} parent=0
    #allocation2 [shape = 'u8[32768]{0}', space=vmem, size = 0x8000, scoped, tag = 'input window, operand 0']
    #allocation3 [shape = 's32[2]{0}', space=sflag, size = 0x8, scoped, tag = 'scoped memory for _positional_encoding_impl.1']
    #allocation4 [shape = 's32[2]{0}', space=sflag, size = 0x8, scoped, tag = 'scoped memory for _positional_encoding_impl.1']
    #allocation5 [shape = 'u8[16384]{0}', space=vmem, size = 0x4000, scoped, tag = 'input window, operand 1, single buffered']
    #allocation6 [shape = 's32[1]{0}', space=sflag, size = 0x4, scoped, tag = 'scoped memory for _positional_encoding_impl.1']
    #allocation7 [shape = 'u8[32768]{0}', space=vmem, size = 0x8000, scoped, tag = 'output window, operand 0']
    %7 = vsyncpa [#allocation3], 0
    %s8 = scalar_lea.sflag [#allocation3], 1
    %9 = vsyncpa %s8, 0
    %10 = vsyncpa [#allocation6], 0
    %11 = vsyncpa [#allocation4], 0
    %s12 = scalar_lea.sflag [#allocation4], 1
    %13 = vsyncpa %s12, 0
    loop: start=0, step=1, limit=4
    $region2: #{_positional_encoding_impl.1} parent=1 // loop_pre_header
      _
    $region3: #{_positional_encoding_impl.1} parent=1 // loop_header
      %s15 = sphi 0, %s19
      %p16 = scmp.ge.s32.totalorder %s15, 4
      %s22 = sphi 0, %s34
      %s23 = sphi 0, %s30
      %s24 = sphi 0, %s22
      %s25 = sphi 0, %s23
      %s26 = sphi 0, %s24
      %s27 = sphi 0, %s25
      %s39 = sphi 0, %s41
      %s42 = sphi 0, %s39
      %s43 = sphi 0, %s42
      %s59 = sphi 0, %s43
      %s65 = sphi 0, %s67
      %s68 = sphi 0, %s65
      %s69 = sphi 0, %s68
      %s85 = sphi 0, %s69
      %s93 = sphi 0, %s95
      %s96 = sphi 0, %s93
      %s97 = sphi 0, %s96
      %s113 = sphi 0, %s97
    $region4: #{_positional_encoding_impl.1} parent=1 // loop_header_branch
      %18 = sbr.rel (%p16) target = $region8
    $region5: #{_positional_encoding_impl.1} parent=1 // loop_body
      %s20 = ssub.s32 %s15, 1
      %s21 = ssub.s32 %s15, 2
      %s28 = sadd.s32 1, %s23
      %p29 = scmp.ge.s32.totalorder %s28, 2
      %s30 = scalar_select %p29, 0, %s28
      %s31 = sadd.s32 1, %s22
      %s32 = scalar_select %p29, %s31, %s22
      %p33 = scmp.ge.s32.totalorder %s32, 1
      %s34 = scalar_select %p33, 0, %s32
      %s35 = ssub.s32 %s23, %s30
      %s36 = ssub.s32 %s22, %s34
      %s37 = sor.u32 %s35, %s36
      %p38 = scmp.eq.s32.totalorder %s37, 0
      %s40 = sadd.s32 %s39, 1
      %s41 = scalar_select %p38, %s39, %s40
      %p44 = pneg %p38
      %p45 = scmp.eq.s32.totalorder %s15, 1
      %p46 = por %p44, %p45
      %p47 = scmp.ne.s32.totalorder %s39, %s42
      %p48 = scmp.eq.s32.totalorder %s15, 0
      %p49 = por %p47, %p48
      %p50 = scmp.ne.s32.totalorder %s39, %s42
      %p51 = scmp.eq.s32.totalorder %s20, 1
      %p52 = por %p50, %p51
      %p53 = scmp.ne.s32.totalorder %s42, %s43
      %p54 = scmp.eq.s32.totalorder %s20, 0
      %p55 = por %p53, %p54
      %p56 = scmp.ne.s32.totalorder %s42, %s43
      %p57 = scmp.eq.s32.totalorder %s21, 1
      %p58 = por %p56, %p57
      %p60 = scmp.ne.s32.totalorder %s43, %s59
      %p61 = scmp.eq.s32.totalorder %s21, 0
      %p62 = por %p60, %p61
      %s63 = ssub.s32 %s22, %s34
      %p64 = scmp.eq.s32.totalorder %s63, 0
      %s66 = sadd.s32 %s65, 1
      %s67 = scalar_select %p64, %s65, %s66
      %p70 = pneg %p64
      %p71 = scmp.eq.s32.totalorder %s15, 1
      %p72 = por %p70, %p71
      %p73 = scmp.ne.s32.totalorder %s65, %s68
      %p74 = scmp.eq.s32.totalorder %s15, 0
      %p75 = por %p73, %p74
      %p76 = scmp.ne.s32.totalorder %s65, %s68
      %p77 = scmp.eq.s32.totalorder %s20, 1
      %p78 = por %p76, %p77
      %p79 = scmp.ne.s32.totalorder %s68, %s69
      %p80 = scmp.eq.s32.totalorder %s20, 0
      %p81 = por %p79, %p80
      %p82 = scmp.ne.s32.totalorder %s68, %s69
      %p83 = scmp.eq.s32.totalorder %s21, 1
      %p84 = por %p82, %p83
      %p86 = scmp.ne.s32.totalorder %s69, %s85
      %p87 = scmp.eq.s32.totalorder %s21, 0
      %p88 = por %p86, %p87
      %s89 = ssub.s32 %s23, %s30
      %s90 = ssub.s32 %s22, %s34
      %s91 = sor.u32 %s89, %s90
      %p92 = scmp.eq.s32.totalorder %s91, 0
      %s94 = sadd.s32 %s93, 1
      %s95 = scalar_select %p92, %s93, %s94
      %p98 = pneg %p92
      %p99 = scmp.eq.s32.totalorder %s15, 1
      %p100 = por %p98, %p99
      %p101 = scmp.ne.s32.totalorder %s93, %s96
      %p102 = scmp.eq.s32.totalorder %s15, 0
      %p103 = por %p101, %p102
      %p104 = scmp.ne.s32.totalorder %s93, %s96
      %p105 = scmp.eq.s32.totalorder %s20, 1
      %p106 = por %p104, %p105
      %p107 = scmp.ne.s32.totalorder %s96, %s97
      %p108 = scmp.eq.s32.totalorder %s20, 0
      %p109 = por %p107, %p108
      %p110 = scmp.ne.s32.totalorder %s96, %s97
      %p111 = scmp.eq.s32.totalorder %s21, 1
      %p112 = por %p110, %p111
      %p114 = scmp.ne.s32.totalorder %s97, %s113
      %p115 = scmp.eq.s32.totalorder %s21, 0
      %p116 = por %p114, %p115
      %p117 = scmp.le.s32.totalorder 1, %s15
      %p118 = scmp.lt.s32.totalorder %s15, 3
      %p119 = pnand %p117, %p118
      %p120 = pneg %p119
      // Predicated region
      $region9: #{_positional_encoding_impl.1} parent=5 // pred_check
        _
      $region10: #{_positional_encoding_impl.1} parent=5 // pred_check_branch
        %122 = sbr.rel (%p119) target = $region12
      $region11: #{_positional_encoding_impl.1} parent=5 // pred_region
        %s123 = ssub.s32 %s15, 1
        // Predicated region
        $region13: #{_positional_encoding_impl.1} parent=11 // pred_check
          %p124 = pneg %p81
        $region14: #{_positional_encoding_impl.1} parent=11 // pred_check_branch
          %126 = sbr.rel (%p124) target = $region16
        $region15: #{_positional_encoding_impl.1} parent=11 // pred_region
          %s128 = ssub.s32 512, 512
          %129 = vsyncadd [#allocation6], %s128
          %s130 = smul.addr %s24, 4
          %s131 = smul.addr %s130, 128
          %s132 = scalar_lea.hbm %s1, %s131
          %s134 = sshll.u32 [#allocation5], 4
          %s135 = int_to_ptr.vmem [resolvable:$true] %s134
          %137 = dma.hbm_to_vmem [thread:$0]  %s132, 512, %s135, [#allocation6]
        $region16: #{_positional_encoding_impl.1} parent=11 // pred_fallthru
          _
      $region12: #{_positional_encoding_impl.1} parent=5 // pred_fallthru
        _
      %p138 = scmp.lt.s32.totalorder %s15, 2
      // Predicated region
      $region17: #{_positional_encoding_impl.1} parent=5 // pred_check
        %p139 = pneg %p138
      $region18: #{_positional_encoding_impl.1} parent=5 // pred_check_branch
        %141 = sbr.rel (%p139) target = $region20
      $region19: #{_positional_encoding_impl.1} parent=5 // pred_region
        // Predicated region
        $region21: #{_positional_encoding_impl.1} parent=19 // pred_check
          %p142 = pneg %p49
        $region22: #{_positional_encoding_impl.1} parent=19 // pred_check_branch
          %144 = sbr.rel (%p142) target = $region24
        $region23: #{_positional_encoding_impl.1} parent=19 // pred_region
          %s145 = sand.u32 %s39, 1
          %s146 = scalar_lea.sflag [#allocation3], %s145
          %s147 = sand.u32 %s39, 1
          %s148 = smul.addr %s147, 32
          %s149 = scalar_lea.vmem [#allocation2], %s148
          %s151 = ssub.s32 512, 512
          %152 = vsyncadd %s146, %s151
          %s153 = smul.addr %s22, 4
          %s154 = smul.addr %s23, 4
          %s155 = sadd.s32 %s153, %s154
          %s156 = smul.addr %s155, 128
          %s157 = scalar_lea.hbm %s0, %s156
          %s159 = sshll.u32 %s149, 4
          %s160 = int_to_ptr.vmem [resolvable:$true] %s159
          %162 = dma.hbm_to_vmem [thread:$0]  %s157, 512, %s160, %s146
        $region24: #{_positional_encoding_impl.1} parent=19 // pred_fallthru
          _
      $region20: #{_positional_encoding_impl.1} parent=5 // pred_fallthru
        _
      %p163 = scmp.le.s32.totalorder 1, %s15
      %p164 = scmp.lt.s32.totalorder %s15, 3
      %p165 = pnand %p163, %p164
      %p166 = pneg %p165
      // Predicated region
      $region25: #{_positional_encoding_impl.1} parent=5 // pred_check
        _
      $region26: #{_positional_encoding_impl.1} parent=5 // pred_check_branch
        %168 = sbr.rel (%p165) target = $region28
      $region27: #{_positional_encoding_impl.1} parent=5 // pred_region
        %s169 = ssub.s32 %s15, 1
        %s170 = sand.u32 %s42, 1
        %s171 = scalar_lea.sflag [#allocation3], %s170
        %s172 = sand.u32 %s42, 1
        %s173 = smul.addr %s172, 32
        %s174 = scalar_lea.vmem [#allocation2], %s173
        // Predicated region
        $region29: #{_positional_encoding_impl.1} parent=27 // pred_check
          %p175 = pneg %p55
        $region30: #{_positional_encoding_impl.1} parent=27 // pred_check_branch
          %177 = sbr.rel (%p175) target = $region32
        $region31: #{_positional_encoding_impl.1} parent=27 // pred_region
          %178 = dma.done %s171, 512
        $region32: #{_positional_encoding_impl.1} parent=27 // pred_fallthru
          _
        // Predicated region
        $region33: #{_positional_encoding_impl.1} parent=27 // pred_check
          %p179 = pneg %p81
        $region34: #{_positional_encoding_impl.1} parent=27 // pred_check_branch
          %181 = sbr.rel (%p179) target = $region36
        $region35: #{_positional_encoding_impl.1} parent=27 // pred_region
          %182 = dma.done [#allocation6], 512
        $region36: #{_positional_encoding_impl.1} parent=27 // pred_fallthru
          _
        %s183 = sand.u32 %s42, 1
        %s184 = scalar_lea.sflag [#allocation3], %s183
        %s185 = sand.u32 %s42, 1
        %s186 = smul.addr %s185, 32
        %s187 = scalar_lea.vmem [#allocation2], %s186
        %p188 = pneg %p55
        %p189 = pneg %p52
        %p190 = pneg %p81
        %p191 = pneg %p78
        %p192 = pneg %p109
        %p193 = pneg %p106
        %s194 = sand.u32 %s96, 1
        %s195 = scalar_lea.sflag [#allocation4], %s194
        %s196 = sand.u32 %s96, 1
        %s197 = smul.addr %s196, 32
        %s198 = scalar_lea.vmem [#allocation7], %s197
        %v199 = vld [vmem:[%s174] sm:$0xff]
        %v200 = vld [vmem:[%s174 + $0x8] sm:$0xff]
        %v201 = vld [vmem:[%s174 + $0x10] sm:$0xff]
        %v202 = vld [vmem:[%s174 + $0x18] sm:$0xff]
        %v203 = vld [vmem:[#allocation5] sm:$0xff]
        %v204 = vld [vmem:[#allocation5 + $0x8] sm:$0xff]
        %v205 = vld [vmem:[#allocation5 + $0x10] sm:$0xff]
        %v206 = vld [vmem:[#allocation5 + $0x18] sm:$0xff]
        %v207 = vadd.f32 %v199, %v203
        %v208 = vadd.f32 %v200, %v204
        %v209 = vadd.f32 %v201, %v205
        %v210 = vadd.f32 %v202, %v206
        %211 = vst [vmem:[%s198] sm:$0xff] %v207
        %212 = vst [vmem:[%s198 + $0x8] sm:$0xff] %v208
        %213 = vst [vmem:[%s198 + $0x10] sm:$0xff] %v209
        %214 = vst [vmem:[%s198 + $0x18] sm:$0xff] %v210
        %s215 = sand.u32 %s96, 1
        %s216 = scalar_lea.sflag [#allocation4], %s215
        %s217 = sand.u32 %s96, 1
        %s218 = smul.addr %s217, 32
        %s219 = scalar_lea.vmem [#allocation7], %s218
        // Predicated region
        $region37: #{_positional_encoding_impl.1} parent=27 // pred_check
          %p220 = pneg %p106
        $region38: #{_positional_encoding_impl.1} parent=27 // pred_check_branch
          %222 = sbr.rel (%p220) target = $region40
        $region39: #{_positional_encoding_impl.1} parent=27 // pred_region
          %s224 = ssub.s32 512, 512
          %225 = vsyncadd %s216, %s224
          %s226 = smul.addr %s24, 4
          %s227 = smul.addr %s25, 4
          %s228 = sadd.s32 %s226, %s227
          %s229 = smul.addr %s228, 128
          %s230 = scalar_lea.hbm %s2, %s229
          %s232 = sshll.u32 %s219, 4
          %s233 = int_to_ptr.vmem [resolvable:$true] %s232
          %235 = dma.vmem_to_hbm [thread:$0]  %s233, 512, %s230, %s216
        $region40: #{_positional_encoding_impl.1} parent=27 // pred_fallthru
          _
      $region28: #{_positional_encoding_impl.1} parent=5 // pred_fallthru
        _
      %p236 = scmp.le.s32.totalorder 2, %s15
      // Predicated region
      $region41: #{_positional_encoding_impl.1} parent=5 // pred_check
        %p237 = pneg %p236
      $region42: #{_positional_encoding_impl.1} parent=5 // pred_check_branch
        %239 = sbr.rel (%p237) target = $region44
      $region43: #{_positional_encoding_impl.1} parent=5 // pred_region
        %s240 = ssub.s32 %s15, 2
        // Predicated region
        $region45: #{_positional_encoding_impl.1} parent=43 // pred_check
          %p241 = pneg %p112
        $region46: #{_positional_encoding_impl.1} parent=43 // pred_check_branch
          %243 = sbr.rel (%p241) target = $region48
        $region47: #{_positional_encoding_impl.1} parent=43 // pred_region
          %s244 = sand.u32 %s97, 1
          %s245 = scalar_lea.sflag [#allocation4], %s244
          %s246 = sand.u32 %s97, 1
          %s247 = smul.addr %s246, 32
          %s248 = scalar_lea.vmem [#allocation7], %s247
          %249 = dma.done %s245, 512
        $region48: #{_positional_encoding_impl.1} parent=43 // pred_fallthru
          _
      $region44: #{_positional_encoding_impl.1} parent=5 // pred_fallthru
        _
    $region6: #{_positional_encoding_impl.1} parent=1 // loop_footer
      %s19 = sadd.s32 1, %s15
    $region7: #{_positional_encoding_impl.1} parent=1 // loop_footer_branch
      %14 = sbr.rel target = $region3
    $region8: #{_positional_encoding_impl.1} parent=1 // loop_exit
      _
    %250 = vsyncpa [#allocation3], 1
    %s251 = scalar_lea.sflag [#allocation3], 1
    %252 = vsyncpa %s251, 1
    %253 = vsyncpa [#allocation6], 1
    %254 = vsyncpa [#allocation4], 1
    %s255 = scalar_lea.sflag [#allocation4], 1
    %256 = vsyncpa %s255, 1

</llo_original>
